<compile_context>
chip_gen: v7x
topology: tpu7x:2x2x1
jax: 0.10.0
libtpu: 0.0.40
codegen_flags: <defaults>
</compile_context>

<pallas_src>
import functools

import jax
import jax.numpy as jnp
from jax.experimental import pallas as pl
from jax.experimental.pallas import tpu as pltpu

_LANE = 128
_MIN_BLOCK_BYTES = 4 * 1024 * 1024      # >= 4 MiB of `inputs` per grid step


def _round_up(a: int, b: int) -> int:
    return (a + b - 1) // b * b


def _cdiv(a: int, b: int) -> int:
    return (a + b - 1) // b


def _vmem_config():
    """Generation-aware (pipeline-buffer budget, scoped vmem limit) in bytes."""
    try:
        phys = int(getattr(pltpu.get_tpu_info(), "vmem_capacity_bytes", 0))
    except Exception:
        phys = 0
    if phys <= 0:
        phys = 64 * 1024 * 1024                       # conservative: v7x per-TC VMEM
    if phys >= 100 * 1024 * 1024:                     # v5e / v6e: 128 MiB physical
        return 48 * 1024 * 1024, 96 * 1024 * 1024
    return 24 * 1024 * 1024, 40 * 1024 * 1024         # v7x: 64 MiB physical


def _pick_row_tile(rows: int, l: int, itemsize: int, sublane: int, budget: int) -> int:
    """Largest sublane-aligned row tile fitting `budget`, biased to >= 4 MiB input
    blocks and an even grid-step count (megacore balance on v7x)."""
    rows_pad = _round_up(rows, sublane)
    per_row = 8 * l * itemsize                  # double-buffered: in + out + 2L result
    tr_cap = max(sublane, (budget // per_row) // sublane * sublane)
    floor_tr = max(sublane, _round_up(_MIN_BLOCK_BYTES // (l * itemsize), sublane))
    floor_tr = min(floor_tr, tr_cap)

    if rows_pad <= tr_cap:
        # Fits in one grid step; split into two equal steps on large problems so
        # both v7x TensorCores get work, otherwise keep the single block.
        if rows_pad >= 2 * floor_tr:
            return _round_up(rows_pad // 2, sublane)
        return rows_pad

    tr = tr_cap
    steps = _cdiv(rows_pad, tr)
    if steps % 2 == 1:
        # Shrink the tile slightly for an even step count, but never below the
        # 4 MiB-per-block floor (step-overhead tax at v7x HBM bandwidth).
        tr_even = max(sublane, _round_up(_cdiv(rows_pad, steps + 1), sublane))
        if tr_even >= floor_tr and _cdiv(rows_pad, tr_even) % 2 == 0:
            tr = tr_even
    return tr


def _gated_residual_kernel(l, lane_aligned, w_ref, x_ref, y_ref, o_ref):
    """One (tr, L) row tile per grid step.

    w_ref : SMEM (1,) f32  -- outputs_weight (learnable scalar)
    x_ref : VMEM (tr, L)   -- `inputs` rows
    y_ref : VMEM (tr, L)   -- `outputs` rows
    o_ref : VMEM (tr, 2L)  -- concat(inputs, gated(outputs)) rows
    """
    w = w_ref[0]
    yf = y_ref[...].astype(jnp.float32)
    # sigmoid(x) == 0.5*(tanh(0.5*x) + 1): one EUP op per element, f32 math.
    gate = 0.5 * (jnp.tanh((0.5 * w) * yf) + 1.0)
    gated = (gate * yf).astype(o_ref.dtype)
    if lane_aligned:
        # L % 128 == 0: both halves are lane-aligned full-width stores.
        o_ref[:, :l] = x_ref[...]
        o_ref[:, l:] = gated
    else:
        # Misaligned L: assemble the row in vregs (unaligned minor-dim concat ->
        # lane rotate/select on XLU/VPU slack) and do one lane-dense full store.
        o_ref[...] = jnp.concatenate([x_ref[...], gated], axis=-1)


def _xla_fallback(inputs, outputs, w_scalar):
    yf = outputs.astype(jnp.float32)
    gated = (jax.nn.sigmoid(w_scalar * yf) * yf).astype(inputs.dtype)
    return jnp.concatenate([inputs, gated], axis=2)


def gated_residual_block(inputs, outputs, outputs_weight,
                         pool_method: str = 'none', pool_output_size=None):
    assert inputs.shape == outputs.shape and inputs.dtype == outputs.dtype
    if pool_method != 'none':
        # TODO(synk): AdaptiveAvgPool1d / AdaptiveMaxPool1d (data-dependent bin
        # sizes) not implemented in the Pallas kernel; module default is 'none'.
        raise NotImplementedError("adaptive pooling not implemented")

    N, C, L = inputs.shape
    dtype = inputs.dtype
    itemsize = jnp.dtype(dtype).itemsize
    sublane = max(8, 32 // itemsize)              # 8 (f32) / 16 (bf16) / 32 (int8)
    w = jnp.asarray(outputs_weight, jnp.float32).reshape((1,))

    budget, vmem_limit = _vmem_config()

    # Escape hatches -> plain XLA:
    #  * 2*L < 128: output rows narrower than one vreg (masked partial stores
    #    dominate); XLA fusion does as well or better.
    #  * very long L: even the sublane-minimum row tile would blow the VMEM budget.
    #    TODO(synk): lane-chunked (row, column, half) grid for very long sequences.
    if 2 * L < _LANE or 8 * sublane * L * itemsize > budget:
        return _xla_fallback(inputs, outputs, w[0])

    rows = N * C
    x = inputs.reshape(rows, L)
    y = outputs.reshape(rows, L)

    tr = _pick_row_tile(rows, L, itemsize, sublane, budget)
    tr = min(tr, rows)                            # a block never exceeds the row extent
    grid = (_cdiv(rows, tr),)

    kernel = functools.partial(_gated_residual_kernel, L, (L % _LANE) == 0)
    res = pl.pallas_call(
        kernel,
        out_shape=jax.ShapeDtypeStruct((rows, 2 * L), dtype),
        grid=grid,
        in_specs=[
            pl.BlockSpec(memory_space=pltpu.SMEM),         # scalar gate weight
            pl.BlockSpec((tr, L), lambda i: (i, 0)),       # inputs rows
            pl.BlockSpec((tr, L), lambda i: (i, 0)),       # outputs rows
        ],
        out_specs=pl.BlockSpec((tr, 2 * L), lambda i: (i, 0)),
        compiler_params=pltpu.CompilerParams(
            dimension_semantics=("parallel",),
            vmem_limit_bytes=vmem_limit,
        ),
    )(w, x, y)
    return res.reshape(N, C, 2 * L)


if __name__ == "__main__":
    key = jax.random.PRNGKey(0)
    k_w = jax.random.fold_in(key, 0)
    # Deterministic parameter init (torch.randn(1) analogue).
    outputs_weight = jax.random.normal(k_w, (1,), dtype=jnp.float32)

    # (N, C, L): misaligned-L kernel path, aligned-L kernel path, tiny-L XLA path.
    cases = [(2, 4, 192), (2, 4, 128), (2, 4, 32)]
    for idx, (n, c, l) in enumerate(cases):
        k_in = jax.random.fold_in(key, 2 * idx + 1)
        k_out = jax.random.fold_in(key, 2 * idx + 2)
        inputs = jax.random.normal(k_in, (n, c, l), dtype=jnp.float32)
        outputs = jax.random.normal(k_out, (n, c, l), dtype=jnp.float32)

        res = jax.block_until_ready(
            gated_residual_block(inputs, outputs, outputs_weight))

        # Pure-JAX reference check.
        gated_ref = jax.nn.sigmoid(outputs_weight[0] * outputs) * outputs
        ref = jnp.concatenate([inputs, gated_ref], axis=2)
        assert res.shape == (n, c, 2 * l)
        err = float(jnp.max(jnp.abs(res - ref)))
        assert jnp.allclose(res, ref, atol=1e-5, rtol=1e-5), (l, err)

    print("KERNEL_OK")
</pallas_src>

<mosaic_0001>
module attributes {stable_mosaic.version = 11 : i64} {
  func.func @_gated_residual_kernel(%arg0: i32, %arg1: memref<1xf32, #tpu.memory_space<smem>>, %arg2: memref<8x192xf32, #tpu.memory_space<vmem>>, %arg3: memref<8x192xf32, #tpu.memory_space<vmem>>, %arg4: memref<8x384xf32, #tpu.memory_space<vmem>>) attributes {dimension_semantics = [#tpu.dimension_semantics<parallel>], iteration_bounds = array<i64: 1>, scalar_prefetch = 0 : i64, scratch_operands = 0 : i64, tpu.core_type = #tpu.core_type<tc>, window_params = [{transform_indices = @transform_0, window_bounds = array<i64: 1>}, {transform_indices = @transform_1, window_bounds = array<i64: 8, 192>}, {transform_indices = @transform_2, window_bounds = array<i64: 8, 192>}, {transform_indices = @transform_3, window_bounds = array<i64: 8, 384>}]} {
    %c0 = arith.constant 0 : index
    %0 = memref.load %arg1[%c0] : memref<1xf32, #tpu.memory_space<smem>>
    %c0_0 = arith.constant 0 : index
    %c0_1 = arith.constant 0 : index
    %1 = vector.load %arg3[%c0_0, %c0_1] : memref<8x192xf32, #tpu.memory_space<vmem>>, vector<8x192xf32>
    %cst = arith.constant 5.000000e-01 : f32
    %2 = arith.mulf %cst, %0 : f32
    %3 = vector.broadcast %2 : f32 to vector<8x192xf32>
    %4 = arith.mulf %3, %1 : vector<8x192xf32>
    %5 = math.tanh %4 : vector<8x192xf32>
    %cst_2 = arith.constant 1.000000e+00 : f32
    %6 = vector.broadcast %cst_2 : f32 to vector<8x192xf32>
    %7 = arith.addf %5, %6 : vector<8x192xf32>
    %cst_3 = arith.constant 5.000000e-01 : f32
    %8 = vector.broadcast %cst_3 : f32 to vector<8x192xf32>
    %9 = arith.mulf %8, %7 : vector<8x192xf32>
    %10 = arith.mulf %9, %1 : vector<8x192xf32>
    %c0_4 = arith.constant 0 : index
    %c0_5 = arith.constant 0 : index
    %11 = vector.load %arg2[%c0_4, %c0_5] : memref<8x192xf32, #tpu.memory_space<vmem>>, vector<8x192xf32>
    %12 = tpu.concatenate %11, %10 in 1 : vector<8x192xf32>, vector<8x192xf32> -> vector<8x384xf32>
    %c0_6 = arith.constant 0 : index
    %c0_7 = arith.constant 0 : index
    %13 = vector.load %arg4[%c0_6, %c0_7] : memref<8x384xf32, #tpu.memory_space<vmem>>, vector<8x384xf32>
    tpu.vector_store %arg4[%c0_6, %c0_7], %12 {strides = array<i32>} : memref<8x384xf32, #tpu.memory_space<vmem>>, vector<8x384xf32>,
    return
  }
  func.func @transform_0(%arg0: i32) -> i32 {
    %c0_i32 = arith.constant 0 : i32
    %c0_i32_0 = arith.constant 0 : i32
    return %c0_i32 : i32
  }
  func.func @transform_1(%arg0: i32) -> (i32, i32) {
    %c0_i32 = arith.constant 0 : i32
    %c0_i32_0 = arith.constant 0 : i32
    return %arg0, %c0_i32 : i32, i32
  }
  func.func @transform_2(%arg0: i32) -> (i32, i32) {
    %c0_i32 = arith.constant 0 : i32
    %c0_i32_0 = arith.constant 0 : i32
    return %arg0, %c0_i32 : i32, i32
  }
  func.func @transform_3(%arg0: i32) -> (i32, i32) {
    %c0_i32 = arith.constant 0 : i32
    %c0_i32_0 = arith.constant 0 : i32
    return %arg0, %c0_i32 : i32, i32
  }
}

</mosaic_0001>

<llo_original>
// kernel: tpu_custom_call.1
$region0: #{tpu_custom_call.1}
  #allocation0 [shape = 'u32[]', space=smem, size = 0x4, offset = 0x4, fixed_abs, tag = 'smem constant byte address 0x4 - core index']
  #allocation1 [shape = 'u32[144,128]{1,0:T(1,128)}', space=vmem, size = 0x12000, scoped, tag = 'internal scratch']
  #allocation2 [shape = 'f32[1]{0:T(128)S(6)}', space=smem, size = 0x200, scoped, tag = 'scoped memory for tpu_custom_call.1']
  %s0 = inlined_call_operand.<no memory space> [shape: f32[1], index: 0, kind: input, shape index: {}]
  %s1 = inlined_call_operand.hbm [shape: f32[8,192], index: 1, kind: input, shape index: {}]
  %s2 = inlined_call_operand.hbm [shape: f32[8,192], index: 2, kind: input, shape index: {}]
  %s3 = inlined_call_operand.hbm [shape: f32[8,384], index: 3, kind: output, shape index: {}]
  %s4 = sld [smem:[#allocation0]]
  $region30: #{tpu_custom_call.1} parent=0
    _
  %s6 = ssub.s32 1, %s4
  %s7 = scalar_select 0, %s6, %s4
  %8 = sst [smem:[#allocation2]] %s0
  $region1: #{tpu_custom_call.1} parent=0
    #allocation3 [shape = 'u8[8192]{0}', space=vmem, size = 0x2000, scoped, tag = 'input window, operand 1, single buffered']
    #allocation4 [shape = 's32[1]{0}', space=sflag, size = 0x4, scoped, tag = 'scoped memory for tpu_custom_call.1']
    #allocation5 [shape = 's32[1]{0}', space=sflag, size = 0x4, scoped, tag = 'scoped memory for tpu_custom_call.1']
    #allocation6 [shape = 'u8[8192]{0}', space=vmem, size = 0x2000, scoped, tag = 'input window, operand 2, single buffered']
    #allocation7 [shape = 's32[1]{0}', space=sflag, size = 0x4, scoped, tag = 'scoped memory for tpu_custom_call.1']
    #allocation8 [shape = 'u8[12288]{0}', space=vmem, size = 0x3000, scoped, tag = 'output window, operand 0, single buffered']
    %9 = vsyncpa [#allocation4], 0
    %10 = vsyncpa [#allocation7], 0
    %11 = vsyncpa [#allocation5], 0
    // Predicated region
    $region2: #{tpu_custom_call.1} parent=1 // pred_check
      _
    $region3: #{tpu_custom_call.1} parent=1 // pred_check_branch
      %13 = sbr.rel (0) target = $region5
    $region4: #{tpu_custom_call.1} parent=1 // pred_region
      _
    $region5: #{tpu_custom_call.1} parent=1 // pred_fallthru
      _
    // Predicated region
    $region6: #{tpu_custom_call.1} parent=1 // pred_check
      _
    $region7: #{tpu_custom_call.1} parent=1 // pred_check_branch
      %15 = sbr.rel (0) target = $region9
    $region8: #{tpu_custom_call.1} parent=1 // pred_region
      %s17 = ssub.s32 256, 256
      %18 = vsyncadd [#allocation4], %s17
      %s20 = sshll.u32 [#allocation3], 4
      %s21 = int_to_ptr.vmem [resolvable:$true] %s20
      %23 = dma.hbm_to_vmem [thread:$0]  %s1, 256, %s21, [#allocation4]
    $region9: #{tpu_custom_call.1} parent=1 // pred_fallthru
      _
    // Predicated region
    $region10: #{tpu_custom_call.1} parent=1 // pred_check
      _
    $region11: #{tpu_custom_call.1} parent=1 // pred_check_branch
      %25 = sbr.rel (0) target = $region13
    $region12: #{tpu_custom_call.1} parent=1 // pred_region
      %s27 = ssub.s32 256, 256
      %28 = vsyncadd [#allocation7], %s27
      %s30 = sshll.u32 [#allocation6], 4
      %s31 = int_to_ptr.vmem [resolvable:$true] %s30
      %33 = dma.hbm_to_vmem [thread:$0]  %s2, 256, %s31, [#allocation7]
    $region13: #{tpu_custom_call.1} parent=1 // pred_fallthru
      _
    // Predicated region
    $region14: #{tpu_custom_call.1} parent=1 // pred_check
      _
    $region15: #{tpu_custom_call.1} parent=1 // pred_check_branch
      %35 = sbr.rel (0) target = $region17
    $region16: #{tpu_custom_call.1} parent=1 // pred_region
      %36 = dma.done [#allocation4], 256
    $region17: #{tpu_custom_call.1} parent=1 // pred_fallthru
      _
    // Predicated region
    $region18: #{tpu_custom_call.1} parent=1 // pred_check
      _
    $region19: #{tpu_custom_call.1} parent=1 // pred_check_branch
      %38 = sbr.rel (0) target = $region21
    $region20: #{tpu_custom_call.1} parent=1 // pred_region
      %39 = dma.done [#allocation7], 256
    $region21: #{tpu_custom_call.1} parent=1 // pred_fallthru
      _
    %s40 = sld [smem:[#allocation2]]
    %v41 = vld [vmem:[#allocation6] sm:$0xff]
    %v42 = vld [vmem:[#allocation6 + $0x8] sm:$0xff]
    %s43 = smul.f32 %s40, 0.5
    %v44 = vstv %s43
    %v45 = vmul.f32 %v44, %v41
    %v46 = vmul.f32 %v44, %v42
    %v47 = vtanh.pop %v45
    %v48 = vtanh.pop %v46
    %v49 = vadd.f32 %v47, 1.0
    %v50 = vadd.f32 %v48, 1.0
    %v51 = vmul.f32 %v49, 0.5
    %v52 = vmul.f32 %v50, 0.5
    %v53 = vmul.f32 %v51, %v41
    %v54 = vmul.f32 %v52, %v42
    %v55 = vld [vmem:[#allocation3] sm:$0xff]
    %v56 = vld [vmem:[#allocation3 + $0x8] sm:$0xff]
    %59 = vrot.lane.b32.xlu0 %v53, 64
    %v60 = vpop.permute.xlu0 %59
    %61 = vrot.lane.b32.xlu0 %v54, 64
    %v62 = vpop.permute.xlu0 %61
    %vm63 = vcmask 523264
    %v64 = vsel %vm63, %v60, %v62
    %v67 = vsel %vm63, %v56, %v60
    %68 = vst [vmem:[#allocation8] sm:$0xff] %v55
    %69 = vst [vmem:[#allocation8 + $0x8] sm:$0xff] %v67
    %70 = vst [vmem:[#allocation8 + $0x10] sm:$0xff] %v64
    // Predicated region
    $region22: #{tpu_custom_call.1} parent=1 // pred_check
      _
    $region23: #{tpu_custom_call.1} parent=1 // pred_check_branch
      %72 = sbr.rel (0) target = $region25
    $region24: #{tpu_custom_call.1} parent=1 // pred_region
      %s74 = ssub.s32 384, 384
      %75 = vsyncadd [#allocation5], %s74
      %s77 = sshll.u32 [#allocation8], 4
      %s78 = int_to_ptr.vmem [resolvable:$true] %s77
      %80 = dma.vmem_to_hbm [thread:$0]  %s78, 384, %s3, [#allocation5]
    $region25: #{tpu_custom_call.1} parent=1 // pred_fallthru
      _
    // Predicated region
    $region26: #{tpu_custom_call.1} parent=1 // pred_check
      _
    $region27: #{tpu_custom_call.1} parent=1 // pred_check_branch
      %82 = sbr.rel (0) target = $region29
    $region28: #{tpu_custom_call.1} parent=1 // pred_region
      %83 = dma.done [#allocation5], 384
    $region29: #{tpu_custom_call.1} parent=1 // pred_fallthru
      _
    %84 = vsyncpa [#allocation4], 1
    %85 = vsyncpa [#allocation7], 1
    %86 = vsyncpa [#allocation5], 1

</llo_original>
